<compile_context>
chip_gen: v5e
topology: v5e:2x2
jax: 0.10.0
libtpu: 0.0.40
codegen_flags: <defaults>
</compile_context>

<pallas_src>
import functools

import jax
import jax.numpy as jnp
from jax.experimental import pallas as pl
from jax.experimental.pallas import tpu as pltpu


def mhsa_kernel(x_ref, wqkv_ref, bqkv_ref, wproj_ref, bproj_ref, o_ref, *, num_heads):
    bt, n, c = x_ref.shape            # (batch_block, N, C)
    h = num_heads
    d = c // h

    # ---- One big QKV projection over the whole batch tile (fills MXU M dim) ----
    x = x_ref[...].reshape(bt * n, c)                       # leading-dim collapse (free)
    qkv = jnp.dot(x, wqkv_ref[...],
                  preferred_element_type=jnp.float32) + bqkv_ref[...]   # (bt*N, 3C)

    # q/k/v keep C = H*D on the lane axis (no (H, N, D) lane-sparse intermediates).
    q = qkv[:, 0 * c:1 * c].reshape(bt, n, c)               # scale already folded into Q
    k = qkv[:, 1 * c:2 * c].reshape(bt, n, c)
    v = qkv[:, 2 * c:3 * c].reshape(bt, n, c)

    # ---- Attention core: heads split only for the (N, N) score contraction ----
    ctx_heads = []
    for hh in range(h):                                     # static unroll, h is tiny
        sl = slice(hh * d, (hh + 1) * d)
        qh = q[:, :, sl]                                    # (bt, N, D) lane slice
        kh = k[:, :, sl]
        vh = v[:, :, sl]

        s = jnp.einsum('bnd,bmd->bnm', qh, kh,
                       preferred_element_type=jnp.float32)  # (bt, N, N)
        s = s - jnp.max(s, axis=-1, keepdims=True)
        p = jnp.exp(s)
        denom = jnp.sum(p, axis=-1, keepdims=True)
        inv = pl.reciprocal(denom, approx=True)             # EUP slot
        inv = inv * (2.0 - denom * inv)                     # one Newton step -> fp32
        p = p * inv

        ctx_heads.append(jnp.einsum('bnm,bmd->bnd', p, vh,
                                    preferred_element_type=jnp.float32))

    # Recombine heads along the lane axis -> (bt*N, C), then ONE output matmul
    # with head recombination folded into the K=C contraction.
    ctx = jnp.concatenate(ctx_heads, axis=-1).reshape(bt * n, c)
    y = jnp.dot(ctx, wproj_ref[...],
                preferred_element_type=jnp.float32) + bproj_ref[...]    # (bt*N, C)
    o_ref[...] = y.reshape(bt, n, c).astype(o_ref.dtype)


# ---------------------------------------------------------------------------
# One-time parameter packing (call at parameter-load time, NOT per forward).
# ---------------------------------------------------------------------------
def pack_mhsa_params(w_qkv, b_qkv, w_proj, b_proj, *, num_heads):
    C = w_qkv.shape[0]
    D = C // num_heads
    assert D * num_heads == C, "embed_dim must be divisible by num_heads"
    scale = D ** (-0.5)
    # Fold the attention scale into the Q third of the QKV projection.
    w_qkv_p = w_qkv.at[:, :C].multiply(scale)
    b_qkv_p = jnp.asarray(b_qkv).reshape(1, 3 * C).at[:, :C].multiply(scale)
    b_proj_p = jnp.asarray(b_proj).reshape(1, C)
    return w_qkv_p, b_qkv_p, w_proj, b_proj_p


def _device_kind():
    try:
        return (jax.devices()[0].device_kind or "").lower()
    except Exception:
        return ""


def _is_two_core_chip():
    kind = _device_kind()
    return ("v7" in kind) or ("7x" in kind)


def _pick_batch_block(batch, seq, *, target_rows=512, force_two_steps=False):
    """Rows-per-grid-step: amortize per-step overhead; only force >=2 steps when
    the chip has 2 TensorCores (megacore sharding of the 'parallel' batch axis)."""
    bt = max(1, min(batch, target_rows // max(seq, 1)))
    while batch % bt:
        bt -= 1
    if force_two_steps and batch >= 2 and batch // bt < 2:
        bt = max(1, bt // 2)
        while batch % bt:
            bt -= 1
    return bt


def multi_head_self_attention(x, w_qkv_p, b_qkv_p, w_proj, b_proj_p, *, num_heads,
                              batch_block=None):
    """Forward pass. Expects parameters already packed by pack_mhsa_params."""
    B, N, C = x.shape
    H = num_heads
    assert (C // H) * H == C, "embed_dim must be divisible by num_heads"

    two_core = _is_two_core_chip()
    if batch_block is None:
        batch_block = _pick_batch_block(B, N, force_two_steps=two_core)
    assert B % batch_block == 0, "batch_block must divide batch"
    grid = (B // batch_block,)

    vmem_limit = (48 if two_core else 64) * 1024 * 1024

    kernel = functools.partial(mhsa_kernel, num_heads=H)

    return pl.pallas_call(
        kernel,
        out_shape=jax.ShapeDtypeStruct((B, N, C), x.dtype),
        grid=grid,
        in_specs=[
            pl.BlockSpec((batch_block, N, C), lambda i: (i, 0, 0)),   # x batch tile
            pl.BlockSpec((C, 3 * C), lambda i: (0, 0)),               # qkv weights (resident)
            pl.BlockSpec((1, 3 * C), lambda i: (0, 0)),               # qkv bias
            pl.BlockSpec((C, C), lambda i: (0, 0)),                   # proj weights
            pl.BlockSpec((1, C), lambda i: (0, 0)),                   # proj bias
        ],
        out_specs=pl.BlockSpec((batch_block, N, C), lambda i: (i, 0, 0)),
        compiler_params=pltpu.CompilerParams(
            dimension_semantics=("parallel",),
            vmem_limit_bytes=vmem_limit,
        ),
    )(x, w_qkv_p, b_qkv_p, w_proj, b_proj_p)


def reference_mhsa(x, w_qkv, b_qkv, w_proj, b_proj, *, num_heads):
    """Plain-JAX reference mirroring the PyTorch forward exactly."""
    B, N, C = x.shape
    D = C // num_heads
    qkv = x @ w_qkv + b_qkv                                        # (B, N, 3C)
    qkv = qkv.reshape(B, N, 3, num_heads, D).transpose(2, 0, 3, 1, 4)
    q, k, v = qkv[0], qkv[1], qkv[2]                               # (B, H, N, D)
    attn = (q @ jnp.swapaxes(k, -2, -1)) * (D ** -0.5)
    attn = jax.nn.softmax(attn, axis=-1)
    out = (attn @ v).transpose(0, 2, 1, 3).reshape(B, N, C)
    return out @ w_proj + b_proj


if __name__ == "__main__":
    B, N, C = 2, 8, 32
    num_heads = 4

    key = jax.random.PRNGKey(0)
    kx, kw1, kb1, kw2, kb2 = jax.random.split(key, 5)

    x = jax.random.normal(kx, (B, N, C), dtype=jnp.float32)

    # Parameters stored as (in, out) so the math is x @ W + b (== torch x @ W.T + b).
    w_qkv = jax.random.normal(kw1, (C, 3 * C), dtype=jnp.float32) * 0.05
    b_qkv = jax.random.normal(kb1, (1, 3 * C), dtype=jnp.float32) * 0.05
    w_proj = jax.random.normal(kw2, (C, C), dtype=jnp.float32) * 0.05
    b_proj = jax.random.normal(kb2, (1, C), dtype=jnp.float32) * 0.05

    # Pack once at "parameter-load" time (scale folded into Q), then run the kernel.
    packed = pack_mhsa_params(w_qkv, b_qkv, w_proj, b_proj, num_heads=num_heads)
    packed = jax.tree_util.tree_map(jax.block_until_ready, packed)

    out = multi_head_self_attention(x, *packed, num_heads=num_heads)
    out = jax.block_until_ready(out)

    ref = reference_mhsa(x, w_qkv, b_qkv[0], w_proj, b_proj[0],
                         num_heads=num_heads)
    assert out.shape == (B, N, C)
    assert jnp.allclose(out, ref, atol=1e-4, rtol=1e-4), "mismatch vs reference"

    print("KERNEL_OK")
</pallas_src>

<mosaic_0001>
module attributes {stable_mosaic.version = 11 : i64} {
  func.func @mhsa_kernel(%arg0: i32, %arg1: memref<2x8x32xf32, #tpu.memory_space<vmem>>, %arg2: memref<32x96xf32, #tpu.memory_space<vmem>>, %arg3: memref<1x96xf32, #tpu.memory_space<vmem>>, %arg4: memref<32x32xf32, #tpu.memory_space<vmem>>, %arg5: memref<1x32xf32, #tpu.memory_space<vmem>>, %arg6: memref<2x8x32xf32, #tpu.memory_space<vmem>>) attributes {dimension_semantics = [#tpu.dimension_semantics<parallel>], iteration_bounds = array<i64: 1>, scalar_prefetch = 0 : i64, scratch_operands = 0 : i64, tpu.core_type = #tpu.core_type<tc>, window_params = [{transform_indices = @transform_0, window_bounds = array<i64: 2, 8, 32>}, {pipeline_mode = #tpu.pipeline_mode<synchronous>, transform_indices = @transform_1, window_bounds = array<i64: 32, 96>}, {pipeline_mode = #tpu.pipeline_mode<synchronous>, transform_indices = @transform_2, window_bounds = array<i64: 1, 96>}, {pipeline_mode = #tpu.pipeline_mode<synchronous>, transform_indices = @transform_3, window_bounds = array<i64: 32, 32>}, {pipeline_mode = #tpu.pipeline_mode<synchronous>, transform_indices = @transform_4, window_bounds = array<i64: 1, 32>}, {transform_indices = @transform_5, window_bounds = array<i64: 2, 8, 32>}]} {
    %c0 = arith.constant 0 : index
    %c0_0 = arith.constant 0 : index
    %c0_1 = arith.constant 0 : index
    %0 = vector.load %arg1[%c0, %c0_0, %c0_1] : memref<2x8x32xf32, #tpu.memory_space<vmem>>, vector<2x8x32xf32>
    %1 = vector.shape_cast %0 : vector<2x8x32xf32> to vector<16x32xf32>
    %c0_2 = arith.constant 0 : index
    %c0_3 = arith.constant 0 : index
    %2 = vector.load %arg2[%c0_2, %c0_3] : memref<32x96xf32, #tpu.memory_space<vmem>>, vector<32x96xf32>
    %cst = arith.constant dense<0.000000e+00> : vector<16x96xf32>
    %3 = tpu.matmul %1, %2, %cst {dimension_numbers = #tpu.dot_dimension_numbers<[1], [0], [0], [1], [0, 0, 1, 1], [], []>} : vector<16x32xf32>, vector<32x96xf32>, vector<16x96xf32> -> vector<16x96xf32>
    %c0_4 = arith.constant 0 : index
    %c0_5 = arith.constant 0 : index
    %4 = vector.load %arg3[%c0_4, %c0_5] : memref<1x96xf32, #tpu.memory_space<vmem>>, vector<1x96xf32>
    %5 = vector.broadcast %4 : vector<1x96xf32> to vector<16x96xf32>
    %6 = arith.addf %3, %5 : vector<16x96xf32>
    %7 = vector.extract_strided_slice %6 {offsets = [0, 0], sizes = [16, 32], strides = [1, 1]} : vector<16x96xf32> to vector<16x32xf32>
    %8 = vector.shape_cast %7 : vector<16x32xf32> to vector<2x8x32xf32>
    %9 = vector.extract_strided_slice %6 {offsets = [0, 32], sizes = [16, 32], strides = [1, 1]} : vector<16x96xf32> to vector<16x32xf32>
    %10 = vector.shape_cast %9 : vector<16x32xf32> to vector<2x8x32xf32>
    %11 = vector.extract_strided_slice %6 {offsets = [0, 64], sizes = [16, 32], strides = [1, 1]} : vector<16x96xf32> to vector<16x32xf32>
    %12 = vector.shape_cast %11 : vector<16x32xf32> to vector<2x8x32xf32>
    %13 = vector.extract_strided_slice %8 {offsets = [0, 0, 0], sizes = [2, 8, 8], strides = [1, 1, 1]} : vector<2x8x32xf32> to vector<2x8x8xf32>
    %14 = vector.extract_strided_slice %10 {offsets = [0, 0, 0], sizes = [2, 8, 8], strides = [1, 1, 1]} : vector<2x8x32xf32> to vector<2x8x8xf32>
    %15 = vector.extract_strided_slice %12 {offsets = [0, 0, 0], sizes = [2, 8, 8], strides = [1, 1, 1]} : vector<2x8x32xf32> to vector<2x8x8xf32>
    "tpu.trace_start"() <{level = 10 : i32, message = "bnd,bmd->bnm"}> : () -> ()
    %cst_6 = arith.constant dense<0.000000e+00> : vector<2x8x8xf32>
    %16 = tpu.matmul %13, %14, %cst_6 {dimension_numbers = #tpu.dot_dimension_numbers<[2], [2], [1], [1], [0, 0, 0, 1, 1, 1], [0], [0]>} : vector<2x8x8xf32>, vector<2x8x8xf32>, vector<2x8x8xf32> -> vector<2x8x8xf32>
    "tpu.trace_stop"() : () -> ()
    %cst_7 = arith.constant dense<0xFF800000> : vector<2x8xf32>
    %17 = vector.multi_reduction <maximumf>, %16, %cst_7 [2] : vector<2x8x8xf32> to vector<2x8xf32>
    %18 = vector.shape_cast %17 : vector<2x8xf32> to vector<2x8x1xf32>
    %19 = vector.broadcast %18 : vector<2x8x1xf32> to vector<2x8x8xf32>
    %20 = arith.subf %16, %19 : vector<2x8x8xf32>
    %21 = math.exp %20 : vector<2x8x8xf32>
    %cst_8 = arith.constant dense<0.000000e+00> : vector<2x8xf32>
    %22 = vector.multi_reduction <add>, %21, %cst_8 [2] : vector<2x8x8xf32> to vector<2x8xf32>
    %23 = vector.shape_cast %22 : vector<2x8xf32> to vector<2x8x1xf32>
    %24 = tpu.reciprocal %23 {approx = true} : vector<2x8x1xf32> -> vector<2x8x1xf32>
    %25 = arith.mulf %23, %24 : vector<2x8x1xf32>
    %cst_9 = arith.constant 2.000000e+00 : f32
    %26 = vector.broadcast %cst_9 : f32 to vector<2x8x1xf32>
    %27 = arith.subf %26, %25 : vector<2x8x1xf32>
    %28 = arith.mulf %24, %27 : vector<2x8x1xf32>
    %29 = vector.broadcast %28 : vector<2x8x1xf32> to vector<2x8x8xf32>
    %30 = arith.mulf %21, %29 : vector<2x8x8xf32>
    "tpu.trace_start"() <{level = 10 : i32, message = "bnm,bmd->bnd"}> : () -> ()
    %cst_10 = arith.constant dense<0.000000e+00> : vector<2x8x8xf32>
    %31 = tpu.matmul %30, %15, %cst_10 {dimension_numbers = #tpu.dot_dimension_numbers<[2], [1], [1], [2], [0, 0, 0, 1, 1, 2], [0], [0]>} : vector<2x8x8xf32>, vector<2x8x8xf32>, vector<2x8x8xf32> -> vector<2x8x8xf32>
    "tpu.trace_stop"() : () -> ()
    %32 = vector.extract_strided_slice %8 {offsets = [0, 0, 8], sizes = [2, 8, 8], strides = [1, 1, 1]} : vector<2x8x32xf32> to vector<2x8x8xf32>
    %33 = vector.extract_strided_slice %10 {offsets = [0, 0, 8], sizes = [2, 8, 8], strides = [1, 1, 1]} : vector<2x8x32xf32> to vector<2x8x8xf32>
    %34 = vector.extract_strided_slice %12 {offsets = [0, 0, 8], sizes = [2, 8, 8], strides = [1, 1, 1]} : vector<2x8x32xf32> to vector<2x8x8xf32>
    "tpu.trace_start"() <{level = 10 : i32, message = "bnd,bmd->bnm"}> : () -> ()
    %cst_11 = arith.constant dense<0.000000e+00> : vector<2x8x8xf32>
    %35 = tpu.matmul %32, %33, %cst_11 {dimension_numbers = #tpu.dot_dimension_numbers<[2], [2], [1], [1], [0, 0, 0, 1, 1, 1], [0], [0]>} : vector<2x8x8xf32>, vector<2x8x8xf32>, vector<2x8x8xf32> -> vector<2x8x8xf32>
    "tpu.trace_stop"() : () -> ()
    %cst_12 = arith.constant dense<0xFF800000> : vector<2x8xf32>
    %36 = vector.multi_reduction <maximumf>, %35, %cst_12 [2] : vector<2x8x8xf32> to vector<2x8xf32>
    %37 = vector.shape_cast %36 : vector<2x8xf32> to vector<2x8x1xf32>
    %38 = vector.broadcast %37 : vector<2x8x1xf32> to vector<2x8x8xf32>
    %39 = arith.subf %35, %38 : vector<2x8x8xf32>
    %40 = math.exp %39 : vector<2x8x8xf32>
    %cst_13 = arith.constant dense<0.000000e+00> : vector<2x8xf32>
    %41 = vector.multi_reduction <add>, %40, %cst_13 [2] : vector<2x8x8xf32> to vector<2x8xf32>
    %42 = vector.shape_cast %41 : vector<2x8xf32> to vector<2x8x1xf32>
    %43 = tpu.reciprocal %42 {approx = true} : vector<2x8x1xf32> -> vector<2x8x1xf32>
    %44 = arith.mulf %42, %43 : vector<2x8x1xf32>
    %cst_14 = arith.constant 2.000000e+00 : f32
    %45 = vector.broadcast %cst_14 : f32 to vector<2x8x1xf32>
    %46 = arith.subf %45, %44 : vector<2x8x1xf32>
    %47 = arith.mulf %43, %46 : vector<2x8x1xf32>
    %48 = vector.broadcast %47 : vector<2x8x1xf32> to vector<2x8x8xf32>
    %49 = arith.mulf %40, %48 : vector<2x8x8xf32>
    "tpu.trace_start"() <{level = 10 : i32, message = "bnm,bmd->bnd"}> : () -> ()
    %cst_15 = arith.constant dense<0.000000e+00> : vector<2x8x8xf32>
    %50 = tpu.matmul %49, %34, %cst_15 {dimension_numbers = #tpu.dot_dimension_numbers<[2], [1], [1], [2], [0, 0, 0, 1, 1, 2], [0], [0]>} : vector<2x8x8xf32>, vector<2x8x8xf32>, vector<2x8x8xf32> -> vector<2x8x8xf32>
    "tpu.trace_stop"() : () -> ()
    %51 = vector.extract_strided_slice %8 {offsets = [0, 0, 16], sizes = [2, 8, 8], strides = [1, 1, 1]} : vector<2x8x32xf32> to vector<2x8x8xf32>
    %52 = vector.extract_strided_slice %10 {offsets = [0, 0, 16], sizes = [2, 8, 8], strides = [1, 1, 1]} : vector<2x8x32xf32> to vector<2x8x8xf32>
    %53 = vector.extract_strided_slice %12 {offsets = [0, 0, 16], sizes = [2, 8, 8], strides = [1, 1, 1]} : vector<2x8x32xf32> to vector<2x8x8xf32>
    "tpu.trace_start"() <{level = 10 : i32, message = "bnd,bmd->bnm"}> : () -> ()
    %cst_16 = arith.constant dense<0.000000e+00> : vector<2x8x8xf32>
    %54 = tpu.matmul %51, %52, %cst_16 {dimension_numbers = #tpu.dot_dimension_numbers<[2], [2], [1], [1], [0, 0, 0, 1, 1, 1], [0], [0]>} : vector<2x8x8xf32>, vector<2x8x8xf32>, vector<2x8x8xf32> -> vector<2x8x8xf32>
    "tpu.trace_stop"() : () -> ()
    %cst_17 = arith.constant dense<0xFF800000> : vector<2x8xf32>
    %55 = vector.multi_reduction <maximumf>, %54, %cst_17 [2] : vector<2x8x8xf32> to vector<2x8xf32>
    %56 = vector.shape_cast %55 : vector<2x8xf32> to vector<2x8x1xf32>
    %57 = vector.broadcast %56 : vector<2x8x1xf32> to vector<2x8x8xf32>
    %58 = arith.subf %54, %57 : vector<2x8x8xf32>
    %59 = math.exp %58 : vector<2x8x8xf32>
    %cst_18 = arith.constant dense<0.000000e+00> : vector<2x8xf32>
    %60 = vector.multi_reduction <add>, %59, %cst_18 [2] : vector<2x8x8xf32> to vector<2x8xf32>
    %61 = vector.shape_cast %60 : vector<2x8xf32> to vector<2x8x1xf32>
    %62 = tpu.reciprocal %61 {approx = true} : vector<2x8x1xf32> -> vector<2x8x1xf32>
    %63 = arith.mulf %61, %62 : vector<2x8x1xf32>
    %cst_19 = arith.constant 2.000000e+00 : f32
    %64 = vector.broadcast %cst_19 : f32 to vector<2x8x1xf32>
    %65 = arith.subf %64, %63 : vector<2x8x1xf32>
    %66 = arith.mulf %62, %65 : vector<2x8x1xf32>
    %67 = vector.broadcast %66 : vector<2x8x1xf32> to vector<2x8x8xf32>
    %68 = arith.mulf %59, %67 : vector<2x8x8xf32>
    "tpu.trace_start"() <{level = 10 : i32, message = "bnm,bmd->bnd"}> : () -> ()
    %cst_20 = arith.constant dense<0.000000e+00> : vector<2x8x8xf32>
    %69 = tpu.matmul %68, %53, %cst_20 {dimension_numbers = #tpu.dot_dimension_numbers<[2], [1], [1], [2], [0, 0, 0, 1, 1, 2], [0], [0]>} : vector<2x8x8xf32>, vector<2x8x8xf32>, vector<2x8x8xf32> -> vector<2x8x8xf32>
    "tpu.trace_stop"() : () -> ()
    %70 = vector.extract_strided_slice %8 {offsets = [0, 0, 24], sizes = [2, 8, 8], strides = [1, 1, 1]} : vector<2x8x32xf32> to vector<2x8x8xf32>
    %71 = vector.extract_strided_slice %10 {offsets = [0, 0, 24], sizes = [2, 8, 8], strides = [1, 1, 1]} : vector<2x8x32xf32> to vector<2x8x8xf32>
    %72 = vector.extract_strided_slice %12 {offsets = [0, 0, 24], sizes = [2, 8, 8], strides = [1, 1, 1]} : vector<2x8x32xf32> to vector<2x8x8xf32>
    "tpu.trace_start"() <{level = 10 : i32, message = "bnd,bmd->bnm"}> : () -> ()
    %cst_21 = arith.constant dense<0.000000e+00> : vector<2x8x8xf32>
    %73 = tpu.matmul %70, %71, %cst_21 {dimension_numbers = #tpu.dot_dimension_numbers<[2], [2], [1], [1], [0, 0, 0, 1, 1, 1], [0], [0]>} : vector<2x8x8xf32>, vector<2x8x8xf32>, vector<2x8x8xf32> -> vector<2x8x8xf32>
    "tpu.trace_stop"() : () -> ()
    %cst_22 = arith.constant dense<0xFF800000> : vector<2x8xf32>
    %74 = vector.multi_reduction <maximumf>, %73, %cst_22 [2] : vector<2x8x8xf32> to vector<2x8xf32>
    %75 = vector.shape_cast %74 : vector<2x8xf32> to vector<2x8x1xf32>
    %76 = vector.broadcast %75 : vector<2x8x1xf32> to vector<2x8x8xf32>
    %77 = arith.subf %73, %76 : vector<2x8x8xf32>
    %78 = math.exp %77 : vector<2x8x8xf32>
    %cst_23 = arith.constant dense<0.000000e+00> : vector<2x8xf32>
    %79 = vector.multi_reduction <add>, %78, %cst_23 [2] : vector<2x8x8xf32> to vector<2x8xf32>
    %80 = vector.shape_cast %79 : vector<2x8xf32> to vector<2x8x1xf32>
    %81 = tpu.reciprocal %80 {approx = true} : vector<2x8x1xf32> -> vector<2x8x1xf32>
    %82 = arith.mulf %80, %81 : vector<2x8x1xf32>
    %cst_24 = arith.constant 2.000000e+00 : f32
    %83 = vector.broadcast %cst_24 : f32 to vector<2x8x1xf32>
    %84 = arith.subf %83, %82 : vector<2x8x1xf32>
    %85 = arith.mulf %81, %84 : vector<2x8x1xf32>
    %86 = vector.broadcast %85 : vector<2x8x1xf32> to vector<2x8x8xf32>
    %87 = arith.mulf %78, %86 : vector<2x8x8xf32>
    "tpu.trace_start"() <{level = 10 : i32, message = "bnm,bmd->bnd"}> : () -> ()
    %cst_25 = arith.constant dense<0.000000e+00> : vector<2x8x8xf32>
    %88 = tpu.matmul %87, %72, %cst_25 {dimension_numbers = #tpu.dot_dimension_numbers<[2], [1], [1], [2], [0, 0, 0, 1, 1, 2], [0], [0]>} : vector<2x8x8xf32>, vector<2x8x8xf32>, vector<2x8x8xf32> -> vector<2x8x8xf32>
    "tpu.trace_stop"() : () -> ()
    %89 = tpu.concatenate %31, %50, %69, %88 in 2 : vector<2x8x8xf32>, vector<2x8x8xf32>, vector<2x8x8xf32>, vector<2x8x8xf32> -> vector<2x8x32xf32>
    %90 = vector.shape_cast %89 : vector<2x8x32xf32> to vector<16x32xf32>
    %c0_26 = arith.constant 0 : index
    %c0_27 = arith.constant 0 : index
    %91 = vector.load %arg4[%c0_26, %c0_27] : memref<32x32xf32, #tpu.memory_space<vmem>>, vector<32x32xf32>
    %cst_28 = arith.constant dense<0.000000e+00> : vector<16x32xf32>
    %92 = tpu.matmul %90, %91, %cst_28 {dimension_numbers = #tpu.dot_dimension_numbers<[1], [0], [0], [1], [0, 0, 1, 1], [], []>} : vector<16x32xf32>, vector<32x32xf32>, vector<16x32xf32> -> vector<16x32xf32>
    %c0_29 = arith.constant 0 : index
    %c0_30 = arith.constant 0 : index
    %93 = vector.load %arg5[%c0_29, %c0_30] : memref<1x32xf32, #tpu.memory_space<vmem>>, vector<1x32xf32>
    %94 = vector.broadcast %93 : vector<1x32xf32> to vector<16x32xf32>
    %95 = arith.addf %92, %94 : vector<16x32xf32>
    %96 = vector.shape_cast %95 : vector<16x32xf32> to vector<2x8x32xf32>
    %c0_31 = arith.constant 0 : index
    %c0_32 = arith.constant 0 : index
    %c0_33 = arith.constant 0 : index
    %97 = vector.load %arg6[%c0_31, %c0_32, %c0_33] : memref<2x8x32xf32, #tpu.memory_space<vmem>>, vector<2x8x32xf32>
    tpu.vector_store %arg6[%c0_31, %c0_32, %c0_33], %96 {strides = array<i32>} : memref<2x8x32xf32, #tpu.memory_space<vmem>>, vector<2x8x32xf32>,
    return
  }
  func.func @transform_0(%arg0: i32) -> (i32, i32, i32) {
    %c0_i32 = arith.constant 0 : i32
    %c0_i32_0 = arith.constant 0 : i32
    %c0_i32_1 = arith.constant 0 : i32
    return %arg0, %c0_i32, %c0_i32_0 : i32, i32, i32
  }
  func.func @transform_1(%arg0: i32) -> (i32, i32) {
    %c0_i32 = arith.constant 0 : i32
    %c0_i32_0 = arith.constant 0 : i32
    %c0_i32_1 = arith.constant 0 : i32
    return %c0_i32, %c0_i32_0 : i32, i32
  }
  func.func @transform_2(%arg0: i32) -> (i32, i32) {
    %c0_i32 = arith.constant 0 : i32
    %c0_i32_0 = arith.constant 0 : i32
    %c0_i32_1 = arith.constant 0 : i32
    return %c0_i32, %c0_i32_0 : i32, i32
  }
  func.func @transform_3(%arg0: i32) -> (i32, i32) {
    %c0_i32 = arith.constant 0 : i32
    %c0_i32_0 = arith.constant 0 : i32
    %c0_i32_1 = arith.constant 0 : i32
    return %c0_i32, %c0_i32_0 : i32, i32
  }
  func.func @transform_4(%arg0: i32) -> (i32, i32) {
    %c0_i32 = arith.constant 0 : i32
    %c0_i32_0 = arith.constant 0 : i32
    %c0_i32_1 = arith.constant 0 : i32
    return %c0_i32, %c0_i32_0 : i32, i32
  }
  func.func @transform_5(%arg0: i32) -> (i32, i32, i32) {
    %c0_i32 = arith.constant 0 : i32
    %c0_i32_0 = arith.constant 0 : i32
    %c0_i32_1 = arith.constant 0 : i32
    return %arg0, %c0_i32, %c0_i32_0 : i32, i32, i32
  }
}

</mosaic_0001>

<llo_original>
// kernel: tpu_custom_call.1
$region0: #{tpu_custom_call.1}
  #allocation0 [shape = 'u32[]', space=smem, size = 0x4, offset = 0x4, fixed_abs, tag = 'smem constant byte address 0x4 - core index']
  #allocation1 [shape = 'u32[72,128]{1,0:T(1,128)}', space=vmem, size = 0x9000, scoped, tag = 'internal scratch']
  %s0 = inlined_call_operand.hbm [shape: f32[2,8,32], index: 0, kind: input, shape index: {}]
  %s1 = inlined_call_operand.hbm [shape: f32[32,96], index: 1, kind: input, shape index: {}]
  %s2 = inlined_call_operand.vmem [shape: f32[1,96], index: 2, kind: input, shape index: {}]
  %s3 = inlined_call_operand.hbm [shape: f32[32,32], index: 3, kind: input, shape index: {}]
  %s4 = inlined_call_operand.vmem [shape: f32[1,32], index: 4, kind: input, shape index: {}]
  %s5 = inlined_call_operand.hbm [shape: f32[2,8,32], index: 5, kind: output, shape index: {}]
  %s6 = sld [smem:[#allocation0]]
  $region42: #{tpu_custom_call.1} parent=0
    _
  %s8 = ssub.s32 1, %s6
  %s9 = scalar_select 0, %s8, %s6
  $region1: #{tpu_custom_call.1} parent=0
    #allocation2 [shape = 'u8[8192]{0}', space=vmem, size = 0x2000, scoped, tag = 'input window, operand 0, single buffered']
    #allocation3 [shape = 's32[1]{0}', space=sflag, size = 0x4, scoped, tag = 'scoped memory for tpu_custom_call.1']
    #allocation4 [shape = 's32[1]{0}', space=sflag, size = 0x4, scoped, tag = 'scoped memory for tpu_custom_call.1']
    #allocation5 [shape = 'u8[16384]{0}', space=vmem, size = 0x4000, scoped, tag = 'input window, operand 1, single buffered']
    #allocation6 [shape = 's32[1]{0}', space=sflag, size = 0x4, scoped, tag = 'scoped memory for tpu_custom_call.1']
    #allocation7 [shape = 'u8[16384]{0}', space=vmem, size = 0x4000, scoped, tag = 'input window, operand 3, single buffered']
    #allocation8 [shape = 'u8[8192]{0}', space=vmem, size = 0x2000, scoped, tag = 'output window, operand 0, single buffered']
    %10 = vsyncpa [#allocation3], 0
    %11 = vsyncpa [#allocation6], 0
    %12 = vsyncpa [#allocation4], 0
    // Predicated region
    $region2: #{tpu_custom_call.1} parent=1 // pred_check
      _
    $region3: #{tpu_custom_call.1} parent=1 // pred_check_branch
      %14 = sbr.rel (0) target = $region5
    $region4: #{tpu_custom_call.1} parent=1 // pred_region
      %16 = vsyncadd [#allocation3], 0
      %s17 = sshll.u32 %s0, 4
      %s18 = int_to_ptr.hbm [resolvable:$true] %s17
      %s19 = sshll.u32 [#allocation2], 4
      %s20 = int_to_ptr.vmem [resolvable:$true] %s19
      %25 = dma.hbm_to_vmem [thread:$0]  %s18, 256, %s20, [#allocation3], 128, 128, 8
    $region5: #{tpu_custom_call.1} parent=1 // pred_fallthru
      _
    // Predicated region
    $region6: #{tpu_custom_call.1} parent=1 // pred_check
      _
    $region7: #{tpu_custom_call.1} parent=1 // pred_check_branch
      %27 = sbr.rel (0) target = $region9
    $region8: #{tpu_custom_call.1} parent=1 // pred_region
      %29 = vsyncadd [#allocation6], 0
      %s30 = sshll.u32 %s1, 4
      %s31 = int_to_ptr.hbm [resolvable:$true] %s30
      %s32 = sshll.u32 [#allocation5], 4
      %s33 = int_to_ptr.vmem [resolvable:$true] %s32
      %38 = dma.hbm_to_vmem [thread:$0]  %s31, 512, %s33, [#allocation6], 128, 128, 8
    $region9: #{tpu_custom_call.1} parent=1 // pred_fallthru
      _
    // Predicated region
    $region10: #{tpu_custom_call.1} parent=1 // pred_check
      _
    $region11: #{tpu_custom_call.1} parent=1 // pred_check_branch
      %40 = sbr.rel (0) target = $region13
    $region12: #{tpu_custom_call.1} parent=1 // pred_region
      _
    $region13: #{tpu_custom_call.1} parent=1 // pred_fallthru
      _
    // Predicated region
    $region14: #{tpu_custom_call.1} parent=1 // pred_check
      _
    $region15: #{tpu_custom_call.1} parent=1 // pred_check_branch
      %42 = sbr.rel (0) target = $region17
    $region16: #{tpu_custom_call.1} parent=1 // pred_region
      %44 = vsyncadd [#allocation6], 0
      %s45 = sshll.u32 %s3, 4
      %s46 = int_to_ptr.hbm [resolvable:$true] %s45
      %s47 = sshll.u32 [#allocation7], 4
      %s48 = int_to_ptr.vmem [resolvable:$true] %s47
      %53 = dma.hbm_to_vmem [thread:$0]  %s46, 512, %s48, [#allocation6], 128, 128, 8
    $region17: #{tpu_custom_call.1} parent=1 // pred_fallthru
      _
    // Predicated region
    $region18: #{tpu_custom_call.1} parent=1 // pred_check
      _
    $region19: #{tpu_custom_call.1} parent=1 // pred_check_branch
      %55 = sbr.rel (0) target = $region21
    $region20: #{tpu_custom_call.1} parent=1 // pred_region
      _
    $region21: #{tpu_custom_call.1} parent=1 // pred_fallthru
      _
    // Predicated region
    $region22: #{tpu_custom_call.1} parent=1 // pred_check
      _
    $region23: #{tpu_custom_call.1} parent=1 // pred_check_branch
      %57 = sbr.rel (0) target = $region25
    $region24: #{tpu_custom_call.1} parent=1 // pred_region
      %59 = dma.done [#allocation3], 256
    $region25: #{tpu_custom_call.1} parent=1 // pred_fallthru
      _
    // Predicated region
    $region26: #{tpu_custom_call.1} parent=1 // pred_check
      _
    $region27: #{tpu_custom_call.1} parent=1 // pred_check_branch
      %61 = sbr.rel (0) target = $region29
    $region28: #{tpu_custom_call.1} parent=1 // pred_region
      %63 = dma.done [#allocation6], 512
    $region29: #{tpu_custom_call.1} parent=1 // pred_fallthru
      _
    // Predicated region
    $region30: #{tpu_custom_call.1} parent=1 // pred_check
      _
    $region31: #{tpu_custom_call.1} parent=1 // pred_check_branch
      %65 = sbr.rel (0) target = $region33
    $region32: #{tpu_custom_call.1} parent=1 // pred_region
      %67 = dma.done [#allocation6], 512
    $region33: #{tpu_custom_call.1} parent=1 // pred_fallthru
      _
    %v68 = vld [vmem:[#allocation2] sm:$0xff]
    %v69 = vld [vmem:[#allocation2 + $0x8] sm:$0xff]
    %v70 = vld [vmem:[#allocation5] sm:$0xff]
    %v71 = vld [vmem:[#allocation5 + $0x8] sm:$0xff]
    %v72 = vld [vmem:[#allocation5 + $0x10] sm:$0xff]
    %v73 = vld [vmem:[#allocation5 + $0x18] sm:$0xff]
    %v74 = vld [vmem:[%s2] sm:$0x1]
    %v76 = vperm.slane %v74, 0
    %vm78 = vcmask 261120
    %v80 = vsel %vm78, %v68, 0
    %v83 = vsel %vm78, %v69, 0
    %85 = vmatpush.msra.mxu0 0.0
    %86 = vmatpush.msra.mxu0 0.0
    %87 = vmatpush.msra.mxu0 0.0
    %88 = vmatpush.msra.mxu0 0.0
    %89 = vmatpush.msra.mxu0 0.0
    %90 = vmatpush.msra.mxu0 0.0
    %91 = vmatpush.msra.mxu0 0.0
    %92 = vmatpush.msra.mxu0 0.0
    %93 = vmatpush.msra.mxu0 0.0
    %94 = vmatpush.msra.mxu0 0.0
    %95 = vmatpush.msra.mxu0 0.0
    %96 = vmatpush.msra.mxu0 0.0
    %97 = vmatpush.msra.mxu0 %v73
    %98 = vmatpush.msra.mxu0 %v72
    %99 = vmatpush.msra.mxu0 %v71
    %100 = vmatpush.msra.mxu0 %v70
    %101 = vmatmul.f32.gmra.mxu0 %v80
    %v102 = vpop.f32.mrf.mxu0
    %v103 = vadd.f32 %v76, %v102
    %104 = vmatmul.f32.gmra.mxu0 %v83
    %v105 = vpop.f32.mrf.mxu0
    %v106 = vadd.f32 %v76, %v105
    %107 = vdwg.mxu0
    %109 = vrot.lane.b32.xlu0 %v103, 96
    %v110 = vpop.permute.xlu0 %109
    %vm111 = vcmask 64512
    %v112 = vsel %vm111, %v103, 0
    %v114 = vsel %vm111, %v110, 0
    %116 = vmatpush.xpose.msra.mxu0 0.0
    %117 = vmatpush.xpose.msra.mxu0 0.0
    %118 = vmatpush.xpose.msra.mxu0 0.0
    %119 = vmatpush.xpose.msra.mxu0 0.0
    %120 = vmatpush.xpose.msra.mxu0 0.0
    %121 = vmatpush.xpose.msra.mxu0 0.0
    %122 = vmatpush.xpose.msra.mxu0 0.0
    %123 = vmatpush.xpose.msra.mxu0 0.0
    %124 = vmatpush.xpose.msra.mxu0 0.0
    %125 = vmatpush.xpose.msra.mxu0 0.0
    %126 = vmatpush.xpose.msra.mxu0 0.0
    %127 = vmatpush.xpose.msra.mxu0 0.0
    %128 = vmatpush.xpose.msra.mxu0 0.0
    %129 = vmatpush.xpose.msra.mxu0 0.0
    %130 = vmatpush.xpose.msra.mxu0 0.0
    %131 = vmatpush.xpose.msra.mxu0 %v114
    %132 = vmatmul.f32.gmra.mxu0 %v112
    %v133 = vpop.f32.mrf.mxu0
    %v134 = vadd.f32 0.0, %v133
    %135 = vdwg.mxu0
    %137 = vrot.lane.b32.xlu0 %v106, 96
    %v138 = vpop.permute.xlu0 %137
    %v139 = vsel %vm111, %v106, 0
    %v141 = vsel %vm111, %v138, 0
    %143 = vmatpush.xpose.msra.mxu0 0.0
    %144 = vmatpush.xpose.msra.mxu0 0.0
    %145 = vmatpush.xpose.msra.mxu0 0.0
    %146 = vmatpush.xpose.msra.mxu0 0.0
    %147 = vmatpush.xpose.msra.mxu0 0.0
    %148 = vmatpush.xpose.msra.mxu0 0.0
    %149 = vmatpush.xpose.msra.mxu0 0.0
    %150 = vmatpush.xpose.msra.mxu0 0.0
    %151 = vmatpush.xpose.msra.mxu0 0.0
    %152 = vmatpush.xpose.msra.mxu0 0.0
    %153 = vmatpush.xpose.msra.mxu0 0.0
    %154 = vmatpush.xpose.msra.mxu0 0.0
    %155 = vmatpush.xpose.msra.mxu0 0.0
    %156 = vmatpush.xpose.msra.mxu0 0.0
    %157 = vmatpush.xpose.msra.mxu0 0.0
    %158 = vmatpush.xpose.msra.mxu0 %v141
    %159 = vmatmul.f32.gmra.mxu0 %v139
    %v160 = vpop.f32.mrf.mxu0
    %v161 = vadd.f32 0.0, %v160
    %162 = vdwg.mxu0
    %v163 = vsel %vm111, %v134, -inf
    %164 = vmax.xlane.f32.xlu0 %v163
    %v165 = vpop.xlane.xlu0 %164
    %v166 = vsel %vm111, %v161, -inf
    %167 = vmax.xlane.f32.xlu0 %v166
    %v168 = vpop.xlane.xlu0 %167
    %v169 = vsub.f32 %v134, %v165
    %v170 = vsub.f32 %v161, %v168
    %v171 = vmul.f32 %v169, 1.442695
    %v172 = vpow.pop %v171
    %v173 = vmul.f32 %v170, 1.442695
    %v174 = vpow.pop %v173
    %v175 = vsel %vm111, %v172, 0.0
    %176 = vadd.xlane.f32.xlu0 %v175
    %v177 = vpop.xlane.xlu0 %176
    %v178 = vsel %vm111, %v174, 0.0
    %179 = vadd.xlane.f32.xlu0 %v178
    %v180 = vpop.xlane.xlu0 %179
    %v181 = vrcp.pop %v177
    %v182 = vrcp.pop %v180
    %v183 = vmul.f32 %v177, %v181
    %v184 = vmul.f32 %v180, %v182
    %v185 = vsub.f32 2.0, %v183
    %v186 = vsub.f32 2.0, %v184
    %v187 = vmul.f32 %v181, %v185
    %v188 = vmul.f32 %v182, %v186
    %v189 = vmul.f32 %v172, %v187
    %v190 = vmul.f32 %v174, %v188
    %191 = vrot.lane.b32.xlu0 %v103, 64
    %v192 = vpop.permute.xlu0 %191
    %v195 = vsel %vm111, %v189, 0
    %197 = vmatpush.msra.mxu0 0.0
    %198 = vmatpush.msra.mxu0 0.0
    %199 = vmatpush.msra.mxu0 0.0
    %200 = vmatpush.msra.mxu0 0.0
    %201 = vmatpush.msra.mxu0 0.0
    %202 = vmatpush.msra.mxu0 0.0
    %203 = vmatpush.msra.mxu0 0.0
    %204 = vmatpush.msra.mxu0 0.0
    %205 = vmatpush.msra.mxu0 0.0
    %206 = vmatpush.msra.mxu0 0.0
    %207 = vmatpush.msra.mxu0 0.0
    %208 = vmatpush.msra.mxu0 0.0
    %209 = vmatpush.msra.mxu0 0.0
    %210 = vmatpush.msra.mxu0 0.0
    %211 = vmatpush.msra.mxu0 0.0
    %212 = vmatpush.msra.mxu0 %v192
    %213 = vmatmul.f32.gmra.mxu0 %v195
    %v214 = vpop.f32.mrf.mxu0
    %v215 = vadd.f32 0.0, %v214
    %216 = vdwg.mxu0
    %217 = vrot.lane.b32.xlu0 %v106, 64
    %v218 = vpop.permute.xlu0 %217
    %v221 = vsel %vm111, %v190, 0
    %223 = vmatpush.msra.mxu0 0.0
    %224 = vmatpush.msra.mxu0 0.0
    %225 = vmatpush.msra.mxu0 0.0
    %226 = vmatpush.msra.mxu0 0.0
    %227 = vmatpush.msra.mxu0 0.0
    %228 = vmatpush.msra.mxu0 0.0
    %229 = vmatpush.msra.mxu0 0.0
    %230 = vmatpush.msra.mxu0 0.0
    %231 = vmatpush.msra.mxu0 0.0
    %232 = vmatpush.msra.mxu0 0.0
    %233 = vmatpush.msra.mxu0 0.0
    %234 = vmatpush.msra.mxu0 0.0
    %235 = vmatpush.msra.mxu0 0.0
    %236 = vmatpush.msra.mxu0 0.0
    %237 = vmatpush.msra.mxu0 0.0
    %238 = vmatpush.msra.mxu0 %v218
    %239 = vmatmul.f32.gmra.mxu0 %v221
    %v240 = vpop.f32.mrf.mxu0
    %v241 = vadd.f32 0.0, %v240
    %242 = vdwg.mxu0
    %243 = vrot.lane.b32.xlu0 %v103, 120
    %v244 = vpop.permute.xlu0 %243
    %245 = vrot.lane.b32.xlu0 %v103, 88
    %v246 = vpop.permute.xlu0 %245
    %v247 = vsel %vm111, %v244, 0
    %v249 = vsel %vm111, %v246, 0
    %251 = vmatpush.xpose.msra.mxu0 0.0
    %252 = vmatpush.xpose.msra.mxu0 0.0
    %253 = vmatpush.xpose.msra.mxu0 0.0
    %254 = vmatpush.xpose.msra.mxu0 0.0
    %255 = vmatpush.xpose.msra.mxu0 0.0
    %256 = vmatpush.xpose.msra.mxu0 0.0
    %257 = vmatpush.xpose.msra.mxu0 0.0
    %258 = vmatpush.xpose.msra.mxu0 0.0
    %259 = vmatpush.xpose.msra.mxu0 0.0
    %260 = vmatpush.xpose.msra.mxu0 0.0
    %261 = vmatpush.xpose.msra.mxu0 0.0
    %262 = vmatpush.xpose.msra.mxu0 0.0
    %263 = vmatpush.xpose.msra.mxu0 0.0
    %264 = vmatpush.xpose.msra.mxu0 0.0
    %265 = vmatpush.xpose.msra.mxu0 0.0
    %266 = vmatpush.xpose.msra.mxu0 %v249
    %267 = vmatmul.f32.gmra.mxu0 %v247
    %v268 = vpop.f32.mrf.mxu0
    %v269 = vadd.f32 0.0, %v268
    %270 = vdwg.mxu0
    %271 = vrot.lane.b32.xlu0 %v106, 120
    %v272 = vpop.permute.xlu0 %271
    %273 = vrot.lane.b32.xlu0 %v106, 88
    %v274 = vpop.permute.xlu0 %273
    %v275 = vsel %vm111, %v272, 0
    %v277 = vsel %vm111, %v274, 0
    %279 = vmatpush.xpose.msra.mxu0 0.0
    %280 = vmatpush.xpose.msra.mxu0 0.0
    %281 = vmatpush.xpose.msra.mxu0 0.0
    %282 = vmatpush.xpose.msra.mxu0 0.0
    %283 = vmatpush.xpose.msra.mxu0 0.0
    %284 = vmatpush.xpose.msra.mxu0 0.0
    %285 = vmatpush.xpose.msra.mxu0 0.0
    %286 = vmatpush.xpose.msra.mxu0 0.0
    %287 = vmatpush.xpose.msra.mxu0 0.0
    %288 = vmatpush.xpose.msra.mxu0 0.0
    %289 = vmatpush.xpose.msra.mxu0 0.0
    %290 = vmatpush.xpose.msra.mxu0 0.0
    %291 = vmatpush.xpose.msra.mxu0 0.0
    %292 = vmatpush.xpose.msra.mxu0 0.0
    %293 = vmatpush.xpose.msra.mxu0 0.0
    %294 = vmatpush.xpose.msra.mxu0 %v277
    %295 = vmatmul.f32.gmra.mxu0 %v275
    %v296 = vpop.f32.mrf.mxu0
    %v297 = vadd.f32 0.0, %v296
    %298 = vdwg.mxu0
    %v299 = vsel %vm111, %v269, -inf
    %300 = vmax.xlane.f32.xlu0 %v299
    %v301 = vpop.xlane.xlu0 %300
    %v302 = vsel %vm111, %v297, -inf
    %303 = vmax.xlane.f32.xlu0 %v302
    %v304 = vpop.xlane.xlu0 %303
    %v305 = vsub.f32 %v269, %v301
    %v306 = vsub.f32 %v297, %v304
    %v307 = vmul.f32 %v305, 1.442695
    %v308 = vpow.pop %v307
    %v309 = vmul.f32 %v306, 1.442695
    %v310 = vpow.pop %v309
    %v311 = vsel %vm111, %v308, 0.0
    %312 = vadd.xlane.f32.xlu0 %v311
    %v313 = vpop.xlane.xlu0 %312
    %v314 = vsel %vm111, %v310, 0.0
    %315 = vadd.xlane.f32.xlu0 %v314
    %v316 = vpop.xlane.xlu0 %315
    %v317 = vrcp.pop %v313
    %v318 = vrcp.pop %v316
    %v319 = vmul.f32 %v313, %v317
    %v320 = vmul.f32 %v316, %v318
    %v321 = vsub.f32 2.0, %v319
    %v322 = vsub.f32 2.0, %v320
    %v323 = vmul.f32 %v317, %v321
    %v324 = vmul.f32 %v318, %v322
    %v325 = vmul.f32 %v308, %v323
    %v326 = vmul.f32 %v310, %v324
    %327 = vrot.lane.b32.xlu0 %v103, 56
    %v328 = vpop.permute.xlu0 %327
    %v331 = vsel %vm111, %v325, 0
    %333 = vmatpush.msra.mxu0 0.0
    %334 = vmatpush.msra.mxu0 0.0
    %335 = vmatpush.msra.mxu0 0.0
    %336 = vmatpush.msra.mxu0 0.0
    %337 = vmatpush.msra.mxu0 0.0
    %338 = vmatpush.msra.mxu0 0.0
    %339 = vmatpush.msra.mxu0 0.0
    %340 = vmatpush.msra.mxu0 0.0
    %341 = vmatpush.msra.mxu0 0.0
    %342 = vmatpush.msra.mxu0 0.0
    %343 = vmatpush.msra.mxu0 0.0
    %344 = vmatpush.msra.mxu0 0.0
    %345 = vmatpush.msra.mxu0 0.0
    %346 = vmatpush.msra.mxu0 0.0
    %347 = vmatpush.msra.mxu0 0.0
    %348 = vmatpush.msra.mxu0 %v328
    %349 = vmatmul.f32.gmra.mxu0 %v331
    %v350 = vpop.f32.mrf.mxu0
    %v351 = vadd.f32 0.0, %v350
    %352 = vdwg.mxu0
    %353 = vrot.lane.b32.xlu0 %v106, 56
    %v354 = vpop.permute.xlu0 %353
    %v357 = vsel %vm111, %v326, 0
    %359 = vmatpush.msra.mxu0 0.0
    %360 = vmatpush.msra.mxu0 0.0
    %361 = vmatpush.msra.mxu0 0.0
    %362 = vmatpush.msra.mxu0 0.0
    %363 = vmatpush.msra.mxu0 0.0
    %364 = vmatpush.msra.mxu0 0.0
    %365 = vmatpush.msra.mxu0 0.0
    %366 = vmatpush.msra.mxu0 0.0
    %367 = vmatpush.msra.mxu0 0.0
    %368 = vmatpush.msra.mxu0 0.0
    %369 = vmatpush.msra.mxu0 0.0
    %370 = vmatpush.msra.mxu0 0.0
    %371 = vmatpush.msra.mxu0 0.0
    %372 = vmatpush.msra.mxu0 0.0
    %373 = vmatpush.msra.mxu0 0.0
    %374 = vmatpush.msra.mxu0 %v354
    %375 = vmatmul.f32.gmra.mxu0 %v357
    %v376 = vpop.f32.mrf.mxu0
    %v377 = vadd.f32 0.0, %v376
    %378 = vdwg.mxu0
    %379 = vrot.lane.b32.xlu0 %v103, 112
    %v380 = vpop.permute.xlu0 %379
    %381 = vrot.lane.b32.xlu0 %v103, 80
    %v382 = vpop.permute.xlu0 %381
    %v383 = vsel %vm111, %v380, 0
    %v385 = vsel %vm111, %v382, 0
    %387 = vmatpush.xpose.msra.mxu0 0.0
    %388 = vmatpush.xpose.msra.mxu0 0.0
    %389 = vmatpush.xpose.msra.mxu0 0.0
    %390 = vmatpush.xpose.msra.mxu0 0.0
    %391 = vmatpush.xpose.msra.mxu0 0.0
    %392 = vmatpush.xpose.msra.mxu0 0.0
    %393 = vmatpush.xpose.msra.mxu0 0.0
    %394 = vmatpush.xpose.msra.mxu0 0.0
    %395 = vmatpush.xpose.msra.mxu0 0.0
    %396 = vmatpush.xpose.msra.mxu0 0.0
    %397 = vmatpush.xpose.msra.mxu0 0.0
    %398 = vmatpush.xpose.msra.mxu0 0.0
    %399 = vmatpush.xpose.msra.mxu0 0.0
    %400 = vmatpush.xpose.msra.mxu0 0.0
    %401 = vmatpush.xpose.msra.mxu0 0.0
    %402 = vmatpush.xpose.msra.mxu0 %v385
    %403 = vmatmul.f32.gmra.mxu0 %v383
    %v404 = vpop.f32.mrf.mxu0
    %v405 = vadd.f32 0.0, %v404
    %406 = vdwg.mxu0
    %407 = vrot.lane.b32.xlu0 %v106, 112
    %v408 = vpop.permute.xlu0 %407
    %409 = vrot.lane.b32.xlu0 %v106, 80
    %v410 = vpop.permute.xlu0 %409
    %v411 = vsel %vm111, %v408, 0
    %v413 = vsel %vm111, %v410, 0
    %415 = vmatpush.xpose.msra.mxu0 0.0
    %416 = vmatpush.xpose.msra.mxu0 0.0
    %417 = vmatpush.xpose.msra.mxu0 0.0
    %418 = vmatpush.xpose.msra.mxu0 0.0
    %419 = vmatpush.xpose.msra.mxu0 0.0
    %420 = vmatpush.xpose.msra.mxu0 0.0
    %421 = vmatpush.xpose.msra.mxu0 0.0
    %422 = vmatpush.xpose.msra.mxu0 0.0
    %423 = vmatpush.xpose.msra.mxu0 0.0
    %424 = vmatpush.xpose.msra.mxu0 0.0
    %425 = vmatpush.xpose.msra.mxu0 0.0
    %426 = vmatpush.xpose.msra.mxu0 0.0
    %427 = vmatpush.xpose.msra.mxu0 0.0
    %428 = vmatpush.xpose.msra.mxu0 0.0
    %429 = vmatpush.xpose.msra.mxu0 0.0
    %430 = vmatpush.xpose.msra.mxu0 %v413
    %431 = vmatmul.f32.gmra.mxu0 %v411
    %v432 = vpop.f32.mrf.mxu0
    %v433 = vadd.f32 0.0, %v432
    %434 = vdwg.mxu0
    %v435 = vsel %vm111, %v405, -inf
    %436 = vmax.xlane.f32.xlu0 %v435
    %v437 = vpop.xlane.xlu0 %436
    %v438 = vsel %vm111, %v433, -inf
    %439 = vmax.xlane.f32.xlu0 %v438
    %v440 = vpop.xlane.xlu0 %439
    %v441 = vsub.f32 %v405, %v437
    %v442 = vsub.f32 %v433, %v440
    %v443 = vmul.f32 %v441, 1.442695
    %v444 = vpow.pop %v443
    %v445 = vmul.f32 %v442, 1.442695
    %v446 = vpow.pop %v445
    %v447 = vsel %vm111, %v444, 0.0
    %448 = vadd.xlane.f32.xlu0 %v447
    %v449 = vpop.xlane.xlu0 %448
    %v450 = vsel %vm111, %v446, 0.0
    %451 = vadd.xlane.f32.xlu0 %v450
    %v452 = vpop.xlane.xlu0 %451
    %v453 = vrcp.pop %v449
    %v454 = vrcp.pop %v452
    %v455 = vmul.f32 %v449, %v453
    %v456 = vmul.f32 %v452, %v454
    %v457 = vsub.f32 2.0, %v455
    %v458 = vsub.f32 2.0, %v456
    %v459 = vmul.f32 %v453, %v457
    %v460 = vmul.f32 %v454, %v458
    %v461 = vmul.f32 %v444, %v459
    %v462 = vmul.f32 %v446, %v460
    %463 = vrot.lane.b32.xlu0 %v103, 48
    %v464 = vpop.permute.xlu0 %463
    %v467 = vsel %vm111, %v461, 0
    %469 = vmatpush.msra.mxu0 0.0
    %470 = vmatpush.msra.mxu0 0.0
    %471 = vmatpush.msra.mxu0 0.0
    %472 = vmatpush.msra.mxu0 0.0
    %473 = vmatpush.msra.mxu0 0.0
    %474 = vmatpush.msra.mxu0 0.0
    %475 = vmatpush.msra.mxu0 0.0
    %476 = vmatpush.msra.mxu0 0.0
    %477 = vmatpush.msra.mxu0 0.0
    %478 = vmatpush.msra.mxu0 0.0
    %479 = vmatpush.msra.mxu0 0.0
    %480 = vmatpush.msra.mxu0 0.0
    %481 = vmatpush.msra.mxu0 0.0
    %482 = vmatpush.msra.mxu0 0.0
    %483 = vmatpush.msra.mxu0 0.0
    %484 = vmatpush.msra.mxu0 %v464
    %485 = vmatmul.f32.gmra.mxu0 %v467
    %v486 = vpop.f32.mrf.mxu0
    %v487 = vadd.f32 0.0, %v486
    %488 = vdwg.mxu0
    %489 = vrot.lane.b32.xlu0 %v106, 48
    %v490 = vpop.permute.xlu0 %489
    %v493 = vsel %vm111, %v462, 0
    %495 = vmatpush.msra.mxu0 0.0
    %496 = vmatpush.msra.mxu0 0.0
    %497 = vmatpush.msra.mxu0 0.0
    %498 = vmatpush.msra.mxu0 0.0
    %499 = vmatpush.msra.mxu0 0.0
    %500 = vmatpush.msra.mxu0 0.0
    %501 = vmatpush.msra.mxu0 0.0
    %502 = vmatpush.msra.mxu0 0.0
    %503 = vmatpush.msra.mxu0 0.0
    %504 = vmatpush.msra.mxu0 0.0
    %505 = vmatpush.msra.mxu0 0.0
    %506 = vmatpush.msra.mxu0 0.0
    %507 = vmatpush.msra.mxu0 0.0
    %508 = vmatpush.msra.mxu0 0.0
    %509 = vmatpush.msra.mxu0 0.0
    %510 = vmatpush.msra.mxu0 %v490
    %511 = vmatmul.f32.gmra.mxu0 %v493
    %v512 = vpop.f32.mrf.mxu0
    %v513 = vadd.f32 0.0, %v512
    %514 = vdwg.mxu0
    %515 = vrot.lane.b32.xlu0 %v103, 104
    %v516 = vpop.permute.xlu0 %515
    %517 = vrot.lane.b32.xlu0 %v103, 72
    %v518 = vpop.permute.xlu0 %517
    %v519 = vsel %vm111, %v516, 0
    %v521 = vsel %vm111, %v518, 0
    %523 = vmatpush.xpose.msra.mxu0 0.0
    %524 = vmatpush.xpose.msra.mxu0 0.0
    %525 = vmatpush.xpose.msra.mxu0 0.0
    %526 = vmatpush.xpose.msra.mxu0 0.0
    %527 = vmatpush.xpose.msra.mxu0 0.0
    %528 = vmatpush.xpose.msra.mxu0 0.0
    %529 = vmatpush.xpose.msra.mxu0 0.0
    %530 = vmatpush.xpose.msra.mxu0 0.0
    %531 = vmatpush.xpose.msra.mxu0 0.0
    %532 = vmatpush.xpose.msra.mxu0 0.0
    %533 = vmatpush.xpose.msra.mxu0 0.0
    %534 = vmatpush.xpose.msra.mxu0 0.0
    %535 = vmatpush.xpose.msra.mxu0 0.0
    %536 = vmatpush.xpose.msra.mxu0 0.0
    %537 = vmatpush.xpose.msra.mxu0 0.0
    %538 = vmatpush.xpose.msra.mxu0 %v521
    %539 = vmatmul.f32.gmra.mxu0 %v519
    %v540 = vpop.f32.mrf.mxu0
    %v541 = vadd.f32 0.0, %v540
    %542 = vdwg.mxu0
    %543 = vrot.lane.b32.xlu0 %v106, 104
    %v544 = vpop.permute.xlu0 %543
    %545 = vrot.lane.b32.xlu0 %v106, 72
    %v546 = vpop.permute.xlu0 %545
    %v547 = vsel %vm111, %v544, 0
    %v549 = vsel %vm111, %v546, 0
    %551 = vmatpush.xpose.msra.mxu0 0.0
    %552 = vmatpush.xpose.msra.mxu0 0.0
    %553 = vmatpush.xpose.msra.mxu0 0.0
    %554 = vmatpush.xpose.msra.mxu0 0.0
    %555 = vmatpush.xpose.msra.mxu0 0.0
    %556 = vmatpush.xpose.msra.mxu0 0.0
    %557 = vmatpush.xpose.msra.mxu0 0.0
    %558 = vmatpush.xpose.msra.mxu0 0.0
    %559 = vmatpush.xpose.msra.mxu0 0.0
    %560 = vmatpush.xpose.msra.mxu0 0.0
    %561 = vmatpush.xpose.msra.mxu0 0.0
    %562 = vmatpush.xpose.msra.mxu0 0.0
    %563 = vmatpush.xpose.msra.mxu0 0.0
    %564 = vmatpush.xpose.msra.mxu0 0.0
    %565 = vmatpush.xpose.msra.mxu0 0.0
    %566 = vmatpush.xpose.msra.mxu0 %v549
    %567 = vmatmul.f32.gmra.mxu0 %v547
    %v568 = vpop.f32.mrf.mxu0
    %v569 = vadd.f32 0.0, %v568
    %570 = vdwg.mxu0
    %v571 = vsel %vm111, %v541, -inf
    %572 = vmax.xlane.f32.xlu0 %v571
    %v573 = vpop.xlane.xlu0 %572
    %v574 = vsel %vm111, %v569, -inf
    %575 = vmax.xlane.f32.xlu0 %v574
    %v576 = vpop.xlane.xlu0 %575
    %v577 = vsub.f32 %v541, %v573
    %v578 = vsub.f32 %v569, %v576
    %v579 = vmul.f32 %v577, 1.442695
    %v580 = vpow.pop %v579
    %v581 = vmul.f32 %v578, 1.442695
    %v582 = vpow.pop %v581
    %v583 = vsel %vm111, %v580, 0.0
    %584 = vadd.xlane.f32.xlu0 %v583
    %v585 = vpop.xlane.xlu0 %584
    %v586 = vsel %vm111, %v582, 0.0
    %587 = vadd.xlane.f32.xlu0 %v586
    %v588 = vpop.xlane.xlu0 %587
    %v589 = vrcp.pop %v585
    %v590 = vrcp.pop %v588
    %v591 = vmul.f32 %v585, %v589
    %v592 = vmul.f32 %v588, %v590
    %v593 = vsub.f32 2.0, %v591
    %v594 = vsub.f32 2.0, %v592
    %v595 = vmul.f32 %v589, %v593
    %v596 = vmul.f32 %v590, %v594
    %v597 = vmul.f32 %v580, %v595
    %v598 = vmul.f32 %v582, %v596
    %599 = vrot.lane.b32.xlu0 %v103, 40
    %v600 = vpop.permute.xlu0 %599
    %v603 = vsel %vm111, %v597, 0
    %605 = vmatpush.msra.mxu0 0.0
    %606 = vmatpush.msra.mxu0 0.0
    %607 = vmatpush.msra.mxu0 0.0
    %608 = vmatpush.msra.mxu0 0.0
    %609 = vmatpush.msra.mxu0 0.0
    %610 = vmatpush.msra.mxu0 0.0
    %611 = vmatpush.msra.mxu0 0.0
    %612 = vmatpush.msra.mxu0 0.0
    %613 = vmatpush.msra.mxu0 0.0
    %614 = vmatpush.msra.mxu0 0.0
    %615 = vmatpush.msra.mxu0 0.0
    %616 = vmatpush.msra.mxu0 0.0
    %617 = vmatpush.msra.mxu0 0.0
    %618 = vmatpush.msra.mxu0 0.0
    %619 = vmatpush.msra.mxu0 0.0
    %620 = vmatpush.msra.mxu0 %v600
    %621 = vmatmul.f32.gmra.mxu0 %v603
    %v622 = vpop.f32.mrf.mxu0
    %v623 = vadd.f32 0.0, %v622
    %624 = vdwg.mxu0
    %625 = vrot.lane.b32.xlu0 %v106, 40
    %v626 = vpop.permute.xlu0 %625
    %v629 = vsel %vm111, %v598, 0
    %631 = vmatpush.msra.mxu0 0.0
    %632 = vmatpush.msra.mxu0 0.0
    %633 = vmatpush.msra.mxu0 0.0
    %634 = vmatpush.msra.mxu0 0.0
    %635 = vmatpush.msra.mxu0 0.0
    %636 = vmatpush.msra.mxu0 0.0
    %637 = vmatpush.msra.mxu0 0.0
    %638 = vmatpush.msra.mxu0 0.0
    %639 = vmatpush.msra.mxu0 0.0
    %640 = vmatpush.msra.mxu0 0.0
    %641 = vmatpush.msra.mxu0 0.0
    %642 = vmatpush.msra.mxu0 0.0
    %643 = vmatpush.msra.mxu0 0.0
    %644 = vmatpush.msra.mxu0 0.0
    %645 = vmatpush.msra.mxu0 0.0
    %646 = vmatpush.msra.mxu0 %v626
    %647 = vmatmul.f32.gmra.mxu0 %v629
    %v648 = vpop.f32.mrf.mxu0
    %v649 = vadd.f32 0.0, %v648
    %650 = vdwg.mxu0
    %653 = vrot.lane.b32.xlu0 %v351, 8
    %v654 = vpop.permute.xlu0 %653
    %655 = vrot.lane.b32.xlu0 %v377, 8
    %v656 = vpop.permute.xlu0 %655
    %661 = vrot.lane.b32.xlu0 %v487, 16
    %v662 = vpop.permute.xlu0 %661
    %663 = vrot.lane.b32.xlu0 %v513, 16
    %v664 = vpop.permute.xlu0 %663
    %669 = vrot.lane.b32.xlu0 %v623, 24
    %v670 = vpop.permute.xlu0 %669
    %671 = vrot.lane.b32.xlu0 %v649, 24
    %v672 = vpop.permute.xlu0 %671
    %v675 = vsel %vm111, %v215, %v654
    %v676 = vsel %vm111, %v241, %v656
    %vm677 = vcmask 130048
    %v678 = vsel %vm677, %v675, %v662
    %v679 = vsel %vm677, %v676, %v664
    %vm680 = vcmask 195584
    %v681 = vsel %vm680, %v678, %v670
    %v682 = vsel %vm680, %v679, %v672
    %v683 = vld [vmem:[#allocation7] sm:$0xff]
    %v684 = vld [vmem:[#allocation7 + $0x8] sm:$0xff]
    %v685 = vld [vmem:[#allocation7 + $0x10] sm:$0xff]
    %v686 = vld [vmem:[#allocation7 + $0x18] sm:$0xff]
    %v687 = vld [vmem:[%s4] sm:$0x1]
    %v689 = vperm.slane %v687, 0
    %v692 = vsel %vm78, %v681, 0
    %v695 = vsel %vm78, %v682, 0
    %697 = vmatpush.msra.mxu0 0.0
    %698 = vmatpush.msra.mxu0 0.0
    %699 = vmatpush.msra.mxu0 0.0
    %700 = vmatpush.msra.mxu0 0.0
    %701 = vmatpush.msra.mxu0 0.0
    %702 = vmatpush.msra.mxu0 0.0
    %703 = vmatpush.msra.mxu0 0.0
    %704 = vmatpush.msra.mxu0 0.0
    %705 = vmatpush.msra.mxu0 0.0
    %706 = vmatpush.msra.mxu0 0.0
    %707 = vmatpush.msra.mxu0 0.0
    %708 = vmatpush.msra.mxu0 0.0
    %709 = vmatpush.msra.mxu0 %v686
    %710 = vmatpush.msra.mxu0 %v685
    %711 = vmatpush.msra.mxu0 %v684
    %712 = vmatpush.msra.mxu0 %v683
    %713 = vmatmul.f32.gmra.mxu0 %v692
    %v714 = vpop.f32.mrf.mxu0
    %v715 = vadd.f32 %v689, %v714
    %716 = vmatmul.f32.gmra.mxu0 %v695
    %v717 = vpop.f32.mrf.mxu0
    %v718 = vadd.f32 %v689, %v717
    %719 = vdwg.mxu0
    %720 = vst.msk [vmem:[#allocation8] sm:$0xff] %vm78, %v715
    %721 = vst.msk [vmem:[#allocation8 + $0x8] sm:$0xff] %vm78, %v718
    // Predicated region
    $region34: #{tpu_custom_call.1} parent=1 // pred_check
      _
    $region35: #{tpu_custom_call.1} parent=1 // pred_check_branch
      %723 = sbr.rel (0) target = $region37
    $region36: #{tpu_custom_call.1} parent=1 // pred_region
      %725 = vsyncadd [#allocation4], 0
      %s726 = sshll.u32 [#allocation8], 4
      %s727 = int_to_ptr.vmem [resolvable:$true] %s726
      %s728 = sshll.u32 %s5, 4
      %s729 = int_to_ptr.hbm [resolvable:$true] %s728
      %734 = dma.vmem_to_hbm [thread:$0]  %s727, 256, %s729, [#allocation4], 128, 128, 8
    $region37: #{tpu_custom_call.1} parent=1 // pred_fallthru
      _
    // Predicated region
    $region38: #{tpu_custom_call.1} parent=1 // pred_check
      _
    $region39: #{tpu_custom_call.1} parent=1 // pred_check_branch
      %736 = sbr.rel (0) target = $region41
    $region40: #{tpu_custom_call.1} parent=1 // pred_region
      %738 = dma.done [#allocation4], 256
    $region41: #{tpu_custom_call.1} parent=1 // pred_fallthru
      _
    %739 = vsyncpa [#allocation3], 1
    %740 = vsyncpa [#allocation6], 1
    %741 = vsyncpa [#allocation4], 1

</llo_original>
